<compile_context>
chip_gen: v6e
topology: v6e:2x2x1
jax: 0.10.0
libtpu: 0.0.40
codegen_flags: <defaults>
</compile_context>

<pallas_src>
import jax
import jax.numpy as jnp
from jax.experimental import pallas as pl
from jax.experimental.pallas import tpu as pltpu

_LANE = 128
_MIB = 1024 * 1024


def _round_up(x, m):
    return ((x + m - 1) // m) * m


def _query_tpu():
    """Best-effort, import-time hardware query (VMEM capacity + TC count)."""
    capacity = 128 * _MIB  # v5e / v6e per-core VMEM
    n_tc = 1               # v5e / v6e: one TensorCore per chip
    try:
        info = pltpu.get_tpu_info()
        capacity = int(getattr(info, "vmem_capacity_bytes", capacity))
        for attr in ("num_cores", "core_count", "tensorcore_count"):
            val = getattr(info, attr, None)
            if val:
                n_tc = 2 if int(val) >= 2 else 1
                break
        else:
            # Heuristic: 64 MiB/TC chips (v7x-class) have 2 TensorCores.
            if capacity <= 64 * _MIB:
                n_tc = 2
    except Exception:
        pass
    return capacity, n_tc


_VMEM_CAPACITY, _NUM_TC = _query_tpu()
# Tile budget: ~24 MiB where the chip allows (elementwise streaming saturates
# HBM at 512+-wide tiles; beyond ~24 MiB is diminishing returns), scaled down
# on 64 MiB/TC parts so double-buffered in+out tiles never spill.
_TILE_BUDGET = min(24 * _MIB, _VMEM_CAPACITY // 3)
_VMEM_LIMIT = int(min(_VMEM_CAPACITY * 3 // 4, _TILE_BUDGET + 8 * _MIB))


def _layer_scale_kernel(x_ref, s_ref, o_ref):
    # x_ref: (tm, tn) activation tile; s_ref: (tm, 1) per-row (= per-channel)
    # scale column broadcast across the lane dim.  Single VPU multiply per
    # element, done in the (promoted) output dtype.
    o_ref[...] = x_ref[...].astype(o_ref.dtype) * s_ref[...]


def _pick_tiles(M, HW, x_itemsize, out_itemsize):
    """Pick (tm, tn) against the generation-aware VMEM tile budget."""
    # Packed sublane tile of the narrowest dtype touching a block
    # (f32 -> 8 rows/vreg, bf16 -> 16, int8/fp8 -> 32).
    sub = 32 // min(x_itemsize, out_itemsize)
    budget = _TILE_BUDGET
    io = x_itemsize + out_itemsize

    # Lane tile: full HW whenever it fits (keeps stores unmasked except the
    # single true edge and the (tm,1) scale block resident across j);
    # otherwise the largest 128-aligned slab the budget allows at tm=sub.
    # Footprint model (double-buffered): 2*x + 2*out tiles of (tm, tn) plus
    # 2 scale tiles of (tm, 1), which pad to a full 128-lane row in VMEM.
    max_tn = (budget - 2 * sub * _LANE * out_itemsize) // (2 * sub * io)
    max_tn = max(_LANE, max_tn)
    tn = HW if HW <= max_tn else (max_tn // _LANE) * _LANE

    # Row tile: as large as the budget allows.  tm == M (full dim) is always a
    # legal block shape; otherwise round down to the packed sublane tile.
    tm_budget = budget // (2 * tn * io + 2 * _LANE * out_itemsize)
    if tm_budget >= M:
        tm = M
    else:
        tm = max(sub, (tm_budget // sub) * sub)

    # Multi-TC (v7x): give the parallel grid an even block count along one
    # axis (>= 4 blocks when the shape allows) so both TensorCores get
    # balanced work.  Skipped on single-TC chips and for small tensors where
    # an extra ~0.35 us grid step costs more than it buys.
    if _NUM_TC >= 2 and M * HW * x_itemsize >= _MIB:
        gm, gn = pl.cdiv(M, tm), pl.cdiv(HW, tn)
        if not (gm % 2 == 0 or gn % 2 == 0):
            for g in (4, 2, 8, 6):
                cand = min(tm, _round_up(pl.cdiv(M, g), sub))
                if cand >= sub and pl.cdiv(M, cand) % 2 == 0:
                    tm = cand
                    break
            else:
                if tn >= 2 * _LANE:
                    half = (tn // 2 // _LANE) * _LANE
                    if half >= _LANE and pl.cdiv(HW, half) % 2 == 0:
                        tn = half
    return int(tm), int(tn)


@jax.jit
def layer_scale(x, gamma):
    """Computes gamma[:, None, None] * x for x of shape (..., C, H, W).

    Matches torch type promotion: the output dtype is result_type(x, gamma),
    so float32 gamma with bfloat16 activations yields float32 output.
    """
    C = gamma.shape[0]
    assert x.shape[-3] == C, (x.shape, C)
    H, W = x.shape[-2], x.shape[-1]
    HW = H * W
    B = 1
    for d in x.shape[:-3]:
        B *= d
    M = B * C

    out_dtype = jnp.result_type(x.dtype, gamma.dtype)
    x_itemsize = jnp.dtype(x.dtype).itemsize
    out_itemsize = jnp.dtype(out_dtype).itemsize

    # Pure contiguous reshape: rows = (batch, channel), lanes = spatial.
    x2d = x.reshape(M, HW)
    # Tiny per-row scale column (broadcast across lanes inside the kernel).
    scale = jnp.broadcast_to(gamma.astype(out_dtype)[None, :], (B, C)).reshape(M, 1)

    tm, tn = _pick_tiles(M, HW, x_itemsize, out_itemsize)
    # Grid order (i, j) with j (lane/HW axis) innermost: the (tm, 1) scale
    # block index (i, 0) stays constant across the inner loop (no re-DMA) and
    # HBM writeback stays contiguous.
    grid = (pl.cdiv(M, tm), pl.cdiv(HW, tn))

    cost = pl.CostEstimate(
        flops=M * HW,
        transcendentals=0,
        bytes_accessed=M * HW * (x_itemsize + out_itemsize) + M * out_itemsize,
    )

    out = pl.pallas_call(
        _layer_scale_kernel,
        out_shape=jax.ShapeDtypeStruct((M, HW), out_dtype),
        grid=grid,
        in_specs=[
            pl.BlockSpec((tm, tn), lambda i, j: (i, j)),
            pl.BlockSpec((tm, 1), lambda i, j: (i, 0)),
        ],
        out_specs=pl.BlockSpec((tm, tn), lambda i, j: (i, j)),
        compiler_params=pltpu.CompilerParams(
            dimension_semantics=("parallel", "parallel"),
            vmem_limit_bytes=_VMEM_LIMIT,
        ),
        cost_estimate=cost,
    )(x2d, scale)
    return out.reshape(x.shape)


if __name__ == "__main__":
    key = jax.random.PRNGKey(0)
    xkey, gkey, x2key = jax.random.split(key, 3)

    init_values = 1e-6

    # Case 1: the module's canonical NCHW case (float32 activations).
    B, C, H, W = 2, 4, 16, 16
    x = jax.random.normal(xkey, (B, C, H, W), jnp.float32)
    # nn.Parameter default init is init_values * ones(dim); perturb so the
    # per-channel broadcast is actually exercised by the reference check.
    gamma = init_values * jnp.ones((C,), jnp.float32) \
        + 0.01 * jax.random.normal(gkey, (C,), jnp.float32)

    out = layer_scale(x, gamma)
    jax.block_until_ready(out)
    ref = gamma[:, None, None] * x
    assert out.shape == x.shape and out.dtype == ref.dtype, (out.shape, out.dtype)
    assert bool(jnp.all(jnp.isfinite(out)))
    assert bool(jnp.allclose(out, ref, rtol=1e-6, atol=1e-6))

    # Case 2: non-128-multiple spatial (masked lane edge) + bfloat16
    # activations with float32 gamma (checks torch-style dtype promotion).
    B2, C2, H2, W2 = 2, 4, 14, 14
    x2 = jax.random.normal(x2key, (B2, C2, H2, W2), jnp.float32).astype(jnp.bfloat16)
    out2 = layer_scale(x2, gamma)
    jax.block_until_ready(out2)
    ref2 = gamma[:, None, None] * x2
    assert out2.shape == x2.shape, out2.shape
    assert out2.dtype == ref2.dtype == jnp.float32, (out2.dtype, ref2.dtype)
    assert bool(jnp.allclose(out2, ref2, rtol=1e-6, atol=1e-6))

    print("KERNEL_OK")
</pallas_src>

<mosaic_0001>
module attributes {stable_mosaic.version = 11 : i64} {
  func.func @_layer_scale_kernel(%arg0: i32, %arg1: i32, %arg2: memref<8x256xf32, #tpu.memory_space<vmem>>, %arg3: memref<8x1xf32, #tpu.memory_space<vmem>>, %arg4: memref<8x256xf32, #tpu.memory_space<vmem>>) attributes {dimension_semantics = [#tpu.dimension_semantics<parallel>, #tpu.dimension_semantics<parallel>], iteration_bounds = array<i64: 1, 1>, scalar_prefetch = 0 : i64, scratch_operands = 0 : i64, tpu.core_type = #tpu.core_type<tc>, window_params = [{transform_indices = @transform_0, window_bounds = array<i64: 8, 256>}, {transform_indices = @transform_1, window_bounds = array<i64: 8, 1>}, {transform_indices = @transform_2, window_bounds = array<i64: 8, 256>}]} {
    %c0 = arith.constant 0 : index
    %c0_0 = arith.constant 0 : index
    %0 = vector.load %arg2[%c0, %c0_0] : memref<8x256xf32, #tpu.memory_space<vmem>>, vector<8x256xf32>
    %c0_1 = arith.constant 0 : index
    %c0_2 = arith.constant 0 : index
    %1 = vector.load %arg3[%c0_1, %c0_2] : memref<8x1xf32, #tpu.memory_space<vmem>>, vector<8x1xf32>
    %2 = vector.broadcast %1 : vector<8x1xf32> to vector<8x256xf32>
    %3 = arith.mulf %0, %2 : vector<8x256xf32>
    %c0_3 = arith.constant 0 : index
    %c0_4 = arith.constant 0 : index
    %4 = vector.load %arg4[%c0_3, %c0_4] : memref<8x256xf32, #tpu.memory_space<vmem>>, vector<8x256xf32>
    tpu.vector_store %arg4[%c0_3, %c0_4], %3 {strides = array<i32>} : memref<8x256xf32, #tpu.memory_space<vmem>>, vector<8x256xf32>,
    return
  }
  func.func @transform_0(%arg0: i32, %arg1: i32) -> (i32, i32) {
    %c0_i32 = arith.constant 0 : i32
    return %arg0, %arg1 : i32, i32
  }
  func.func @transform_1(%arg0: i32, %arg1: i32) -> (i32, i32) {
    %c0_i32 = arith.constant 0 : i32
    %c0_i32_0 = arith.constant 0 : i32
    return %arg0, %c0_i32 : i32, i32
  }
  func.func @transform_2(%arg0: i32, %arg1: i32) -> (i32, i32) {
    %c0_i32 = arith.constant 0 : i32
    return %arg0, %arg1 : i32, i32
  }
}

</mosaic_0001>

<llo_original>
// kernel: layer_scale.1
$region0: #{layer_scale.1}
  #allocation0 [shape = 'u32[]', space=smem, size = 0x4, offset = 0x4, fixed_abs, tag = 'smem constant byte address 0x4 - core index']
  #allocation1 [shape = 'u32[144,128]{1,0:T(1,128)}', space=vmem, size = 0x12000, scoped, tag = 'internal scratch']
  %s0 = inlined_call_operand.vmem [shape: f32[8,256], index: 0, kind: input, shape index: {}]
  %s1 = inlined_call_operand.vmem [shape: f32[8,1], index: 1, kind: input, shape index: {}]
  %s2 = inlined_call_operand.vmem [shape: f32[8,256], index: 2, kind: output, shape index: {}]
  %s3 = sld [smem:[#allocation0]]
  $region18: #{layer_scale.1} parent=0
    _
  %s5 = ssub.s32 1, %s3
  %s6 = scalar_select 0, %s5, %s3
  // Predicated region
  $region2: #{layer_scale.1} parent=0 // pred_check
    _
  $region3: #{layer_scale.1} parent=0 // pred_check_branch
    %8 = sbr.rel (0) target = $region5
  $region4: #{layer_scale.1} parent=0 // pred_region
    _
  $region5: #{layer_scale.1} parent=0 // pred_fallthru
    _
  // Predicated region
  $region6: #{layer_scale.1} parent=0 // pred_check
    _
  $region7: #{layer_scale.1} parent=0 // pred_check_branch
    %10 = sbr.rel (0) target = $region9
  $region8: #{layer_scale.1} parent=0 // pred_region
    _
  $region9: #{layer_scale.1} parent=0 // pred_fallthru
    _
  %v11 = vld [vmem:[%s0] sm:$0xff]
  %v12 = vld [vmem:[%s0 + $0x8] sm:$0xff]
  %v13 = vld [vmem:[%s1] sm:$0xff]
  %15 = vset.pattern.permute.xlu0 0
  %16 = vperm.xlu0 %15, %v13
  %v17 = vpop.permute.xlu0 %16
  %v19 = vmul.f32 %v11, %v17
  %v20 = vmul.f32 %v12, %v17
  %21 = vst [vmem:[%s2] sm:$0xff] %v19
  %22 = vst [vmem:[%s2 + $0x8] sm:$0xff] %v20
  // Predicated region
  $region10: #{layer_scale.1} parent=0 // pred_check
    _
  $region11: #{layer_scale.1} parent=0 // pred_check_branch
    %24 = sbr.rel (0) target = $region13
  $region12: #{layer_scale.1} parent=0 // pred_region
    _
  $region13: #{layer_scale.1} parent=0 // pred_fallthru
    _
  // Predicated region
  $region14: #{layer_scale.1} parent=0 // pred_check
    _
  $region15: #{layer_scale.1} parent=0 // pred_check_branch
    %26 = sbr.rel (0) target = $region17
  $region16: #{layer_scale.1} parent=0 // pred_region
    _
  $region17: #{layer_scale.1} parent=0 // pred_fallthru
    _

</llo_original>
